<compile_context>
chip_gen: v7x
topology: tpu7x:2x2x1
jax: 0.10.0
libtpu: 0.0.40
codegen_flags: <defaults>
</compile_context>

<pallas_src>
import math
import functools

import jax
import jax.numpy as jnp
from jax.experimental import pallas as pl
from jax.experimental.pallas import tpu as pltpu


def _round_up(a, b):
    return ((a + b - 1) // b) * b


# ----------------------------------------------------------------------------
# Kernel: fused ([GLU] -> Linear) chain over all layers for one row tile.
# ----------------------------------------------------------------------------
def _gated_linear_kernel(x_ref, *refs, input_glu, n_split):
    """refs = (wa_0, ba_0, wg_0, bg_0, ..., w_last, b_last, out_ref).

    wa/wg are the value/gate column blocks (in, out/2) of every layer whose
    output feeds a GLU; w_last is the final (in, out) weight.  Weights are
    bf16 (MXU operands), biases are f32 with shape (1, out).
    """
    out_ref = refs[-1]
    params = refs[:-1]

    h = x_ref[...]
    if input_glu:
        # GLU on the raw kernel input (no-downsample path).  This is the only
        # remaining lane-internal split; it happens once per tile and the lane
        # rotate runs on the XLU slot, hidden under the MXU/VPU work below.
        h = h.astype(jnp.float32)
        half = h.shape[-1] // 2
        h = h[:, :half] * jax.nn.sigmoid(h[:, half:])

    idx = 0
    for _ in range(n_split):
        wa, ba, wg, bg = params[idx], params[idx + 1], params[idx + 2], params[idx + 3]
        idx += 4
        hb = h.astype(wa.dtype)                                    # bf16 operands
        a = jnp.dot(hb, wa[...], preferred_element_type=jnp.float32) + ba[...]
        g = jnp.dot(hb, wg[...], preferred_element_type=jnp.float32) + bg[...]
        h = a * jax.nn.sigmoid(g)                                  # GLU in f32 (v5e-safe)

    w, b = params[idx], params[idx + 1]
    out = jnp.dot(h.astype(w.dtype), w[...], preferred_element_type=jnp.float32) + b[...]
    out_ref[...] = out.astype(out_ref.dtype)


# ----------------------------------------------------------------------------
# Parameter construction (deterministic, mirrors the PyTorch __init__)
# ----------------------------------------------------------------------------
def _make_weightnorm_linear(key, in_f, out_f, dropout=0.0):
    """Mirror of Linear(): weight ~ N(0, sqrt((1-dropout)/in_f)), bias = 0,
    then weight_norm (v = weight, g = ||v|| per output row)."""
    std = math.sqrt((1.0 - dropout) / in_f)
    v = jax.random.normal(key, (out_f, in_f), dtype=jnp.float32) * std   # torch (out, in)
    g = jnp.linalg.norm(v, axis=1)
    b = jnp.zeros((out_f,), dtype=jnp.float32)
    return v, g, b


def _effective_weight(v, g):
    """weight_norm forward: w = g * v / ||v||_row (norm over the 'in' dim)."""
    norm = jnp.linalg.norm(v, axis=1, keepdims=True)
    return (g[:, None] * v) / norm                                  # (out, in)


class GatedLinearPallas:
    """JAX/Pallas port of GatedLinear (forward only / inference; dropout only
    affects the init std, exactly as in the PyTorch module)."""

    COMPUTE_DTYPE = jnp.bfloat16

    def __init__(self, in_features, out_features, depth=2, downsample=0,
                 dropout=0.0, bias=True, key=None):
        if key is None:
            key = jax.random.PRNGKey(0)
        self._out_features = out_features
        self._downsample = isinstance(downsample, int) and downsample > 0
        # TODO(synk): bias=False is unusable in the reference PyTorch module
        # (it zeroes m.bias unconditionally); we always carry a zero-init bias,
        # which is mathematically identical to "no bias" at init.

        keys = jax.random.split(key, depth + 1)
        raw = []                                   # (w_t (in,out) f32, b f32)
        if self._downsample:
            if in_features % downsample != 0:
                raise ValueError("in_features must be a multiple of downsample step")
            hidden = out_features * (2 ** depth)
            v, g, b = _make_weightnorm_linear(keys[0], in_features // downsample,
                                              hidden, dropout)
            w_t = jnp.transpose(_effective_weight(v, g))            # (in//ds, hidden)
            # Fold Downsample (x[..., ::ds]) into the weight: embed its rows at
            # stride `ds` into a zero matrix so the kernel consumes full-width x
            # and no strided activation copy is ever materialized in HBM.
            rows_idx = jnp.arange(0, in_features, downsample)
            w_full = jnp.zeros((in_features, hidden), jnp.float32).at[rows_idx, :].set(w_t)
            raw.append((w_full, b))
            self._input_glu = False
        else:
            if in_features != out_features * (2 ** depth):
                raise ValueError("in_features must equal out_features * 2**depth "
                                 "when not downsampling")
            self._input_glu = True

        for k in range(1, depth + 1):
            f = out_features * (2 ** (depth - k))
            v, g, b = _make_weightnorm_linear(keys[k], f, f, dropout)
            raw.append((jnp.transpose(_effective_weight(v, g)), b))

        # Every layer except the last is followed by a GLU: split its weight into
        # [W_a | W_g] output-column blocks so the GLU never slices lanes of a
        # matmul output.  Weights in bf16 (MXU operands), biases in f32.
        cdt = self.COMPUTE_DTYPE
        params = []
        for i, (w, b) in enumerate(raw):
            if i < len(raw) - 1:
                half = w.shape[1] // 2
                params += [w[:, :half].astype(cdt), b[:half].reshape(1, -1),
                           w[:, half:].astype(cdt), b[half:].reshape(1, -1)]
            else:
                params += [w.astype(cdt), b.reshape(1, -1)]
        self._params = params
        self._n_split = len(raw) - 1

    # ------------------------------------------------------------------
    @staticmethod
    def _pick_row_tile(rows):
        # Prefer a large tile that divides rows exactly (no padding copy);
        # otherwise a fixed 512-row tile with zero padding.  Always aim for
        # >= 2 grid steps so the row axis can be sharded across both v7x TCs.
        for cand in (512, 256):
            if rows % cand == 0 and rows // cand >= 2:
                return cand
        if rows > 512:
            return 512
        return max(8, _round_up(max(1, pl.cdiv(rows, 2)), 8))

    def __call__(self, x):
        B, T, C = x.shape
        rows = B * T
        x2d = x.reshape(rows, C)
        out_dim = self._out_features

        tile = self._pick_row_tile(rows)
        padded = _round_up(rows, tile)
        if padded != rows:
            # Zero padding keeps GLU/sigmoid/matmul finite on the pad rows;
            # they are sliced off below.
            x2d = jnp.pad(x2d, ((0, padded - rows), (0, 0)))
        grid = (padded // tile,)

        in_specs = [pl.BlockSpec((tile, C), lambda i: (i, 0))]
        args = [x2d]
        for p in self._params:
            # TODO(synk): pipeline_mode=pl.Buffered(1) on these grid-invariant
            # blocks would halve their VMEM footprint on v7x; left off here for
            # compile-safety on the pinned JAX version (weights are tiny anyway).
            in_specs.append(pl.BlockSpec(p.shape, lambda i: (0, 0)))
            args.append(p)

        # TODO(synk): for out_features < 128 the final store is lane-masked;
        # packing 128/out_features row-groups into a lane-dense slab would need
        # an in-kernel layout-aware repack (pltpu.einshape) and is deferred.
        out_specs = pl.BlockSpec((tile, out_dim), lambda i: (i, 0))

        itemsize = x2d.dtype.itemsize
        tile_bytes = tile * (C + out_dim) * itemsize
        param_bytes = sum(int(p.size) * p.dtype.itemsize for p in self._params)
        vmem_limit = int(min(max(2 * tile_bytes + 2 * param_bytes + (4 << 20),
                                 32 << 20), 64 << 20))

        kernel = functools.partial(_gated_linear_kernel,
                                   input_glu=self._input_glu,
                                   n_split=self._n_split)
        out2d = pl.pallas_call(
            kernel,
            out_shape=jax.ShapeDtypeStruct((padded, out_dim), x.dtype),
            grid=grid,
            in_specs=in_specs,
            out_specs=out_specs,
            compiler_params=pltpu.CompilerParams(
                dimension_semantics=("parallel",),
                vmem_limit_bytes=vmem_limit),
        )(*args)

        if padded != rows:
            out2d = out2d[:rows]
        return out2d.reshape(B, T, out_dim)

    # ------------------------------------------------------------------
    # Pure-JAX reference (mirrors the kernel math: same bf16 weights/casts,
    # f32 accumulation), for correctness checking.
    def reference(self, x):
        B, T, C = x.shape
        h = x.reshape(B * T, C)
        if self._input_glu:
            h = h.astype(jnp.float32)
            half = C // 2
            h = h[:, :half] * jax.nn.sigmoid(h[:, half:])
        idx = 0
        for _ in range(self._n_split):
            wa, ba, wg, bg = self._params[idx:idx + 4]
            idx += 4
            hb = h.astype(wa.dtype)
            a = jnp.dot(hb, wa, preferred_element_type=jnp.float32) + ba
            g = jnp.dot(hb, wg, preferred_element_type=jnp.float32) + bg
            h = a * jax.nn.sigmoid(g)
        w, b = self._params[idx], self._params[idx + 1]
        out = jnp.dot(h.astype(w.dtype), w, preferred_element_type=jnp.float32) + b
        return out.astype(x.dtype).reshape(B, T, self._out_features)


# ----------------------------------------------------------------------------
if __name__ == "__main__":
    key = jax.random.PRNGKey(0)
    k_x, k_p, k_x2, k_p2 = jax.random.split(key, 4)

    # --- no-downsample path: depth=2, out_features=32 -> in_features = 128 ---
    B, T = 2, 8
    out_features, depth = 32, 2
    in_features = out_features * (2 ** depth)             # 128
    x = jax.random.normal(k_x, (B, T, in_features), dtype=jnp.float32)

    module = GatedLinearPallas(in_features, out_features, depth=depth,
                               downsample=0, dropout=0.0, bias=True, key=k_p)
    y = jax.block_until_ready(module(x))
    y_ref = module.reference(x)
    assert y.shape == (B, T, out_features), y.shape
    assert jnp.allclose(y, y_ref, atol=2e-2, rtol=2e-2), "mismatch (no-downsample path)"

    # --- downsample path: downsample=2, in_features = 2 * 32 * 2^2 = 256 -----
    ds = 2
    in_features2 = out_features * (2 ** depth) * ds        # 256
    x2 = jax.random.normal(k_x2, (B, T, in_features2), dtype=jnp.float32)
    module2 = GatedLinearPallas(in_features2, out_features, depth=depth,
                                downsample=ds, dropout=0.0, bias=True, key=k_p2)
    y2 = jax.block_until_ready(module2(x2))
    y2_ref = module2.reference(x2)
    assert y2.shape == (B, T, out_features), y2.shape
    assert jnp.allclose(y2, y2_ref, atol=2e-2, rtol=2e-2), "mismatch (downsample path)"

    print("KERNEL_OK")
</pallas_src>

<mosaic_0001>
module attributes {stable_mosaic.version = 11 : i64} {
  func.func @_gated_linear_kernel(%arg0: i32, %arg1: memref<8x128xf32, #tpu.memory_space<vmem>>, %arg2: memref<64x32xbf16, #tpu.memory_space<vmem>>, %arg3: memref<1x32xf32, #tpu.memory_space<vmem>>, %arg4: memref<64x32xbf16, #tpu.memory_space<vmem>>, %arg5: memref<1x32xf32, #tpu.memory_space<vmem>>, %arg6: memref<32x32xbf16, #tpu.memory_space<vmem>>, %arg7: memref<1x32xf32, #tpu.memory_space<vmem>>, %arg8: memref<8x32xf32, #tpu.memory_space<vmem>>) attributes {dimension_semantics = [#tpu.dimension_semantics<parallel>], iteration_bounds = array<i64: 2>, scalar_prefetch = 0 : i64, scratch_operands = 0 : i64, tpu.core_type = #tpu.core_type<tc>, window_params = [{transform_indices = @transform_0, window_bounds = array<i64: 8, 128>}, {pipeline_mode = #tpu.pipeline_mode<synchronous>, transform_indices = @transform_1, window_bounds = array<i64: 64, 32>}, {pipeline_mode = #tpu.pipeline_mode<synchronous>, transform_indices = @transform_2, window_bounds = array<i64: 1, 32>}, {pipeline_mode = #tpu.pipeline_mode<synchronous>, transform_indices = @transform_3, window_bounds = array<i64: 64, 32>}, {pipeline_mode = #tpu.pipeline_mode<synchronous>, transform_indices = @transform_4, window_bounds = array<i64: 1, 32>}, {pipeline_mode = #tpu.pipeline_mode<synchronous>, transform_indices = @transform_5, window_bounds = array<i64: 32, 32>}, {pipeline_mode = #tpu.pipeline_mode<synchronous>, transform_indices = @transform_6, window_bounds = array<i64: 1, 32>}, {transform_indices = @transform_7, window_bounds = array<i64: 8, 32>}]} {
    %c0 = arith.constant 0 : index
    %c0_0 = arith.constant 0 : index
    %0 = vector.load %arg1[%c0, %c0_0] : memref<8x128xf32, #tpu.memory_space<vmem>>, vector<8x128xf32>
    %1 = vector.extract_strided_slice %0 {offsets = [0, 0], sizes = [8, 64], strides = [1, 1]} : vector<8x128xf32> to vector<8x64xf32>
    %2 = vector.extract_strided_slice %0 {offsets = [0, 64], sizes = [8, 64], strides = [1, 1]} : vector<8x128xf32> to vector<8x64xf32>
    %3 = arith.negf %2 : vector<8x64xf32>
    %4 = math.exp %3 : vector<8x64xf32>
    %cst = arith.constant 1.000000e+00 : f32
    %5 = vector.broadcast %cst : f32 to vector<8x64xf32>
    %6 = arith.addf %5, %4 : vector<8x64xf32>
    %7 = arith.divf %5, %6 : vector<8x64xf32>
    %8 = arith.mulf %1, %7 : vector<8x64xf32>
    %9 = arith.truncf %8 : vector<8x64xf32> to vector<8x64xbf16>
    %c0_1 = arith.constant 0 : index
    %c0_2 = arith.constant 0 : index
    %10 = vector.load %arg2[%c0_1, %c0_2] : memref<64x32xbf16, #tpu.memory_space<vmem>>, vector<64x32xbf16>
    %cst_3 = arith.constant dense<0.000000e+00> : vector<8x32xf32>
    %11 = tpu.matmul %9, %10, %cst_3 {dimension_numbers = #tpu.dot_dimension_numbers<[1], [0], [0], [1], [0, 0, 1, 1], [], []>} : vector<8x64xbf16>, vector<64x32xbf16>, vector<8x32xf32> -> vector<8x32xf32>
    %c0_4 = arith.constant 0 : index
    %c0_5 = arith.constant 0 : index
    %12 = vector.load %arg3[%c0_4, %c0_5] : memref<1x32xf32, #tpu.memory_space<vmem>>, vector<1x32xf32>
    %13 = vector.broadcast %12 : vector<1x32xf32> to vector<8x32xf32>
    %14 = arith.addf %11, %13 : vector<8x32xf32>
    %c0_6 = arith.constant 0 : index
    %c0_7 = arith.constant 0 : index
    %15 = vector.load %arg4[%c0_6, %c0_7] : memref<64x32xbf16, #tpu.memory_space<vmem>>, vector<64x32xbf16>
    %cst_8 = arith.constant dense<0.000000e+00> : vector<8x32xf32>
    %16 = tpu.matmul %9, %15, %cst_8 {dimension_numbers = #tpu.dot_dimension_numbers<[1], [0], [0], [1], [0, 0, 1, 1], [], []>} : vector<8x64xbf16>, vector<64x32xbf16>, vector<8x32xf32> -> vector<8x32xf32>
    %c0_9 = arith.constant 0 : index
    %c0_10 = arith.constant 0 : index
    %17 = vector.load %arg5[%c0_9, %c0_10] : memref<1x32xf32, #tpu.memory_space<vmem>>, vector<1x32xf32>
    %18 = vector.broadcast %17 : vector<1x32xf32> to vector<8x32xf32>
    %19 = arith.addf %16, %18 : vector<8x32xf32>
    %20 = arith.negf %19 : vector<8x32xf32>
    %21 = math.exp %20 : vector<8x32xf32>
    %cst_11 = arith.constant 1.000000e+00 : f32
    %22 = vector.broadcast %cst_11 : f32 to vector<8x32xf32>
    %23 = arith.addf %22, %21 : vector<8x32xf32>
    %24 = arith.divf %22, %23 : vector<8x32xf32>
    %25 = arith.mulf %14, %24 : vector<8x32xf32>
    %26 = arith.truncf %25 : vector<8x32xf32> to vector<8x32xbf16>
    %c0_12 = arith.constant 0 : index
    %c0_13 = arith.constant 0 : index
    %27 = vector.load %arg6[%c0_12, %c0_13] : memref<32x32xbf16, #tpu.memory_space<vmem>>, vector<32x32xbf16>
    %cst_14 = arith.constant dense<0.000000e+00> : vector<8x32xf32>
    %28 = tpu.matmul %26, %27, %cst_14 {dimension_numbers = #tpu.dot_dimension_numbers<[1], [0], [0], [1], [0, 0, 1, 1], [], []>} : vector<8x32xbf16>, vector<32x32xbf16>, vector<8x32xf32> -> vector<8x32xf32>
    %c0_15 = arith.constant 0 : index
    %c0_16 = arith.constant 0 : index
    %29 = vector.load %arg7[%c0_15, %c0_16] : memref<1x32xf32, #tpu.memory_space<vmem>>, vector<1x32xf32>
    %30 = vector.broadcast %29 : vector<1x32xf32> to vector<8x32xf32>
    %31 = arith.addf %28, %30 : vector<8x32xf32>
    %c0_17 = arith.constant 0 : index
    %c0_18 = arith.constant 0 : index
    %32 = vector.load %arg8[%c0_17, %c0_18] : memref<8x32xf32, #tpu.memory_space<vmem>>, vector<8x32xf32>
    tpu.vector_store %arg8[%c0_17, %c0_18], %31 {strides = array<i32>} : memref<8x32xf32, #tpu.memory_space<vmem>>, vector<8x32xf32>,
    return
  }
  func.func @transform_0(%arg0: i32) -> (i32, i32) {
    %c0_i32 = arith.constant 0 : i32
    %c0_i32_0 = arith.constant 0 : i32
    return %arg0, %c0_i32 : i32, i32
  }
  func.func @transform_1(%arg0: i32) -> (i32, i32) {
    %c0_i32 = arith.constant 0 : i32
    %c0_i32_0 = arith.constant 0 : i32
    %c0_i32_1 = arith.constant 0 : i32
    return %c0_i32, %c0_i32_0 : i32, i32
  }
  func.func @transform_2(%arg0: i32) -> (i32, i32) {
    %c0_i32 = arith.constant 0 : i32
    %c0_i32_0 = arith.constant 0 : i32
    %c0_i32_1 = arith.constant 0 : i32
    return %c0_i32, %c0_i32_0 : i32, i32
  }
  func.func @transform_3(%arg0: i32) -> (i32, i32) {
    %c0_i32 = arith.constant 0 : i32
    %c0_i32_0 = arith.constant 0 : i32
    %c0_i32_1 = arith.constant 0 : i32
    return %c0_i32, %c0_i32_0 : i32, i32
  }
  func.func @transform_4(%arg0: i32) -> (i32, i32) {
    %c0_i32 = arith.constant 0 : i32
    %c0_i32_0 = arith.constant 0 : i32
    %c0_i32_1 = arith.constant 0 : i32
    return %c0_i32, %c0_i32_0 : i32, i32
  }
  func.func @transform_5(%arg0: i32) -> (i32, i32) {
    %c0_i32 = arith.constant 0 : i32
    %c0_i32_0 = arith.constant 0 : i32
    %c0_i32_1 = arith.constant 0 : i32
    return %c0_i32, %c0_i32_0 : i32, i32
  }
  func.func @transform_6(%arg0: i32) -> (i32, i32) {
    %c0_i32 = arith.constant 0 : i32
    %c0_i32_0 = arith.constant 0 : i32
    %c0_i32_1 = arith.constant 0 : i32
    return %c0_i32, %c0_i32_0 : i32, i32
  }
  func.func @transform_7(%arg0: i32) -> (i32, i32) {
    %c0_i32 = arith.constant 0 : i32
    %c0_i32_0 = arith.constant 0 : i32
    return %arg0, %c0_i32 : i32, i32
  }
}

</mosaic_0001>

<llo_original>
// kernel: tpu_custom_call.1
$region0: #{tpu_custom_call.1}
  #allocation0 [shape = 'u32[]', space=smem, size = 0x4, offset = 0x4, fixed_abs, tag = 'smem constant byte address 0x4 - core index']
  #allocation1 [shape = 'u32[144,128]{1,0:T(1,128)}', space=vmem, size = 0x12000, scoped, tag = 'internal scratch']
  %s0 = inlined_call_operand.vmem [shape: f32[16,128], index: 0, kind: input, shape index: {}]
  %s1 = inlined_call_operand.vmem [shape: bf16[64,32], index: 1, kind: input, shape index: {}]
  %s2 = inlined_call_operand.vmem [shape: f32[1,32], index: 2, kind: input, shape index: {}]
  %s3 = inlined_call_operand.vmem [shape: bf16[64,32], index: 3, kind: input, shape index: {}]
  %s4 = inlined_call_operand.vmem [shape: f32[1,32], index: 4, kind: input, shape index: {}]
  %s5 = inlined_call_operand.vmem [shape: bf16[32,32], index: 5, kind: input, shape index: {}]
  %s6 = inlined_call_operand.vmem [shape: f32[1,32], index: 6, kind: input, shape index: {}]
  %s7 = inlined_call_operand.hbm [shape: f32[16,32], index: 7, kind: output, shape index: {}]
  %s8 = sld [smem:[#allocation0]]
  $region61: #{tpu_custom_call.1} parent=0
    _
  %s10 = ssub.s32 1, %s8
  %s11 = scalar_select 0, %s10, %s8
  $region1: #{tpu_custom_call.1} parent=0
    #allocation2 [shape = 'u8[8192]{0}', space=vmem, size = 0x2000, scoped, tag = 'output window, operand 0']
    #allocation3 [shape = 's32[2]{0}', space=sflag, size = 0x8, scoped, tag = 'scoped memory for tpu_custom_call.1']
    %12 = vsyncpa [#allocation3], 0
    %s13 = scalar_lea.sflag [#allocation3], 1
    %14 = vsyncpa %s13, 0
    loop: start=0, step=1, limit=4
    $region2: #{tpu_custom_call.1} parent=1 // loop_pre_header
      _
    $region3: #{tpu_custom_call.1} parent=1 // loop_header
      %s16 = sphi 0, %s20
      %p17 = scmp.ge.s32.totalorder %s16, 4
      %s26 = sphi 0, %s28
      %s29 = sphi 0, %s26
      %s30 = sphi 0, %s29
      %s46 = sphi 0, %s30
      %s50 = sphi 0, %s50
      %s52 = sphi 0, %s50
      %s53 = sphi 0, %s52
      %s67 = sphi 0, %s53
      %s71 = sphi 0, %s71
      %s73 = sphi 0, %s71
      %s74 = sphi 0, %s73
      %s88 = sphi 0, %s74
      %s92 = sphi 0, %s92
      %s94 = sphi 0, %s92
      %s95 = sphi 0, %s94
      %s109 = sphi 0, %s95
      %s113 = sphi 0, %s113
      %s115 = sphi 0, %s113
      %s116 = sphi 0, %s115
      %s130 = sphi 0, %s116
      %s134 = sphi 0, %s134
      %s136 = sphi 0, %s134
      %s137 = sphi 0, %s136
      %s151 = sphi 0, %s137
      %s155 = sphi 0, %s155
      %s157 = sphi 0, %s155
      %s158 = sphi 0, %s157
      %s172 = sphi 0, %s158
      %s178 = sphi 0, %s180
      %s181 = sphi 0, %s178
      %s182 = sphi 0, %s181
      %s198 = sphi 0, %s182
    $region4: #{tpu_custom_call.1} parent=1 // loop_header_branch
      %19 = sbr.rel (%p17) target = $region8
    $region5: #{tpu_custom_call.1} parent=1 // loop_body
      %s21 = ssub.s32 %s16, 1
      %s22 = ssub.s32 %s16, 2
      %s23 = sadd.s32 %s16, 1
      %s24 = ssub.s32 %s16, %s23
      %p25 = scmp.eq.s32.totalorder %s24, 0
      %s27 = sadd.s32 %s26, 1
      %s28 = scalar_select %p25, %s26, %s27
      %p31 = pneg %p25
      %p32 = scmp.eq.s32.totalorder %s16, 1
      %p33 = por %p31, %p32
      %p34 = scmp.ne.s32.totalorder %s26, %s29
      %p35 = scmp.eq.s32.totalorder %s16, 0
      %p36 = por %p34, %p35
      %p37 = scmp.ne.s32.totalorder %s26, %s29
      %p38 = scmp.eq.s32.totalorder %s21, 1
      %p39 = por %p37, %p38
      %p40 = scmp.ne.s32.totalorder %s29, %s30
      %p41 = scmp.eq.s32.totalorder %s21, 0
      %p42 = por %p40, %p41
      %p43 = scmp.ne.s32.totalorder %s29, %s30
      %p44 = scmp.eq.s32.totalorder %s22, 1
      %p45 = por %p43, %p44
      %p47 = scmp.ne.s32.totalorder %s30, %s46
      %p48 = scmp.eq.s32.totalorder %s22, 0
      %p49 = por %p47, %p48
      %s51 = sadd.s32 %s50, 1
      %p54 = scmp.eq.s32.totalorder %s16, 1
      %p55 = scmp.ne.s32.totalorder %s50, %s52
      %p56 = scmp.eq.s32.totalorder %s16, 0
      %p57 = por %p55, %p56
      %p58 = scmp.ne.s32.totalorder %s50, %s52
      %p59 = scmp.eq.s32.totalorder %s21, 1
      %p60 = por %p58, %p59
      %p61 = scmp.ne.s32.totalorder %s52, %s53
      %p62 = scmp.eq.s32.totalorder %s21, 0
      %p63 = por %p61, %p62
      %p64 = scmp.ne.s32.totalorder %s52, %s53
      %p65 = scmp.eq.s32.totalorder %s22, 1
      %p66 = por %p64, %p65
      %p68 = scmp.ne.s32.totalorder %s53, %s67
      %p69 = scmp.eq.s32.totalorder %s22, 0
      %p70 = por %p68, %p69
      %s72 = sadd.s32 %s71, 1
      %p75 = scmp.eq.s32.totalorder %s16, 1
      %p76 = scmp.ne.s32.totalorder %s71, %s73
      %p77 = scmp.eq.s32.totalorder %s16, 0
      %p78 = por %p76, %p77
      %p79 = scmp.ne.s32.totalorder %s71, %s73
      %p80 = scmp.eq.s32.totalorder %s21, 1
      %p81 = por %p79, %p80
      %p82 = scmp.ne.s32.totalorder %s73, %s74
      %p83 = scmp.eq.s32.totalorder %s21, 0
      %p84 = por %p82, %p83
      %p85 = scmp.ne.s32.totalorder %s73, %s74
      %p86 = scmp.eq.s32.totalorder %s22, 1
      %p87 = por %p85, %p86
      %p89 = scmp.ne.s32.totalorder %s74, %s88
      %p90 = scmp.eq.s32.totalorder %s22, 0
      %p91 = por %p89, %p90
      %s93 = sadd.s32 %s92, 1
      %p96 = scmp.eq.s32.totalorder %s16, 1
      %p97 = scmp.ne.s32.totalorder %s92, %s94
      %p98 = scmp.eq.s32.totalorder %s16, 0
      %p99 = por %p97, %p98
      %p100 = scmp.ne.s32.totalorder %s92, %s94
      %p101 = scmp.eq.s32.totalorder %s21, 1
      %p102 = por %p100, %p101
      %p103 = scmp.ne.s32.totalorder %s94, %s95
      %p104 = scmp.eq.s32.totalorder %s21, 0
      %p105 = por %p103, %p104
      %p106 = scmp.ne.s32.totalorder %s94, %s95
      %p107 = scmp.eq.s32.totalorder %s22, 1
      %p108 = por %p106, %p107
      %p110 = scmp.ne.s32.totalorder %s95, %s109
      %p111 = scmp.eq.s32.totalorder %s22, 0
      %p112 = por %p110, %p111
      %s114 = sadd.s32 %s113, 1
      %p117 = scmp.eq.s32.totalorder %s16, 1
      %p118 = scmp.ne.s32.totalorder %s113, %s115
      %p119 = scmp.eq.s32.totalorder %s16, 0
      %p120 = por %p118, %p119
      %p121 = scmp.ne.s32.totalorder %s113, %s115
      %p122 = scmp.eq.s32.totalorder %s21, 1
      %p123 = por %p121, %p122
      %p124 = scmp.ne.s32.totalorder %s115, %s116
      %p125 = scmp.eq.s32.totalorder %s21, 0
      %p126 = por %p124, %p125
      %p127 = scmp.ne.s32.totalorder %s115, %s116
      %p128 = scmp.eq.s32.totalorder %s22, 1
      %p129 = por %p127, %p128
      %p131 = scmp.ne.s32.totalorder %s116, %s130
      %p132 = scmp.eq.s32.totalorder %s22, 0
      %p133 = por %p131, %p132
      %s135 = sadd.s32 %s134, 1
      %p138 = scmp.eq.s32.totalorder %s16, 1
      %p139 = scmp.ne.s32.totalorder %s134, %s136
      %p140 = scmp.eq.s32.totalorder %s16, 0
      %p141 = por %p139, %p140
      %p142 = scmp.ne.s32.totalorder %s134, %s136
      %p143 = scmp.eq.s32.totalorder %s21, 1
      %p144 = por %p142, %p143
      %p145 = scmp.ne.s32.totalorder %s136, %s137
      %p146 = scmp.eq.s32.totalorder %s21, 0
      %p147 = por %p145, %p146
      %p148 = scmp.ne.s32.totalorder %s136, %s137
      %p149 = scmp.eq.s32.totalorder %s22, 1
      %p150 = por %p148, %p149
      %p152 = scmp.ne.s32.totalorder %s137, %s151
      %p153 = scmp.eq.s32.totalorder %s22, 0
      %p154 = por %p152, %p153
      %s156 = sadd.s32 %s155, 1
      %p159 = scmp.eq.s32.totalorder %s16, 1
      %p160 = scmp.ne.s32.totalorder %s155, %s157
      %p161 = scmp.eq.s32.totalorder %s16, 0
      %p162 = por %p160, %p161
      %p163 = scmp.ne.s32.totalorder %s155, %s157
      %p164 = scmp.eq.s32.totalorder %s21, 1
      %p165 = por %p163, %p164
      %p166 = scmp.ne.s32.totalorder %s157, %s158
      %p167 = scmp.eq.s32.totalorder %s21, 0
      %p168 = por %p166, %p167
      %p169 = scmp.ne.s32.totalorder %s157, %s158
      %p170 = scmp.eq.s32.totalorder %s22, 1
      %p171 = por %p169, %p170
      %p173 = scmp.ne.s32.totalorder %s158, %s172
      %p174 = scmp.eq.s32.totalorder %s22, 0
      %p175 = por %p173, %p174
      %s176 = ssub.s32 %s16, %s23
      %p177 = scmp.eq.s32.totalorder %s176, 0
      %s179 = sadd.s32 %s178, 1
      %s180 = scalar_select %p177, %s178, %s179
      %p183 = pneg %p177
      %p184 = scmp.eq.s32.totalorder %s16, 1
      %p185 = por %p183, %p184
      %p186 = scmp.ne.s32.totalorder %s178, %s181
      %p187 = scmp.eq.s32.totalorder %s16, 0
      %p188 = por %p186, %p187
      %p189 = scmp.ne.s32.totalorder %s178, %s181
      %p190 = scmp.eq.s32.totalorder %s21, 1
      %p191 = por %p189, %p190
      %p192 = scmp.ne.s32.totalorder %s181, %s182
      %p193 = scmp.eq.s32.totalorder %s21, 0
      %p194 = por %p192, %p193
      %p195 = scmp.ne.s32.totalorder %s181, %s182
      %p196 = scmp.eq.s32.totalorder %s22, 1
      %p197 = por %p195, %p196
      %p199 = scmp.ne.s32.totalorder %s182, %s198
      %p200 = scmp.eq.s32.totalorder %s22, 0
      %p201 = por %p199, %p200
      %p202 = scmp.le.s32.totalorder 1, %s16
      %p203 = scmp.lt.s32.totalorder %s16, 3
      %p204 = pnand %p202, %p203
      %p205 = pneg %p204
      // Predicated region
      $region9: #{tpu_custom_call.1} parent=5 // pred_check
        _
      $region10: #{tpu_custom_call.1} parent=5 // pred_check_branch
        %207 = sbr.rel (%p204) target = $region12
      $region11: #{tpu_custom_call.1} parent=5 // pred_region
        %s208 = ssub.s32 %s16, 1
        // Predicated region
        $region13: #{tpu_custom_call.1} parent=11 // pred_check
          %p209 = pneg %p63
        $region14: #{tpu_custom_call.1} parent=11 // pred_check_branch
          %211 = sbr.rel (%p209) target = $region16
        $region15: #{tpu_custom_call.1} parent=11 // pred_region
          _
        $region16: #{tpu_custom_call.1} parent=11 // pred_fallthru
          _
        // Predicated region
        $region17: #{tpu_custom_call.1} parent=11 // pred_check
          %p212 = pneg %p84
        $region18: #{tpu_custom_call.1} parent=11 // pred_check_branch
          %214 = sbr.rel (%p212) target = $region20
        $region19: #{tpu_custom_call.1} parent=11 // pred_region
          _
        $region20: #{tpu_custom_call.1} parent=11 // pred_fallthru
          _
        // Predicated region
        $region21: #{tpu_custom_call.1} parent=11 // pred_check
          %p215 = pneg %p105
        $region22: #{tpu_custom_call.1} parent=11 // pred_check_branch
          %217 = sbr.rel (%p215) target = $region24
        $region23: #{tpu_custom_call.1} parent=11 // pred_region
          _
        $region24: #{tpu_custom_call.1} parent=11 // pred_fallthru
          _
        // Predicated region
        $region25: #{tpu_custom_call.1} parent=11 // pred_check
          %p218 = pneg %p126
        $region26: #{tpu_custom_call.1} parent=11 // pred_check_branch
          %220 = sbr.rel (%p218) target = $region28
        $region27: #{tpu_custom_call.1} parent=11 // pred_region
          _
        $region28: #{tpu_custom_call.1} parent=11 // pred_fallthru
          _
        // Predicated region
        $region29: #{tpu_custom_call.1} parent=11 // pred_check
          %p221 = pneg %p147
        $region30: #{tpu_custom_call.1} parent=11 // pred_check_branch
          %223 = sbr.rel (%p221) target = $region32
        $region31: #{tpu_custom_call.1} parent=11 // pred_region
          _
        $region32: #{tpu_custom_call.1} parent=11 // pred_fallthru
          _
        // Predicated region
        $region33: #{tpu_custom_call.1} parent=11 // pred_check
          %p224 = pneg %p168
        $region34: #{tpu_custom_call.1} parent=11 // pred_check_branch
          %226 = sbr.rel (%p224) target = $region36
        $region35: #{tpu_custom_call.1} parent=11 // pred_region
          _
        $region36: #{tpu_custom_call.1} parent=11 // pred_fallthru
          _
      $region12: #{tpu_custom_call.1} parent=5 // pred_fallthru
        _
      %p227 = scmp.lt.s32.totalorder %s16, 2
      // Predicated region
      $region37: #{tpu_custom_call.1} parent=5 // pred_check
        %p228 = pneg %p227
      $region38: #{tpu_custom_call.1} parent=5 // pred_check_branch
        %230 = sbr.rel (%p228) target = $region40
      $region39: #{tpu_custom_call.1} parent=5 // pred_region
        // Predicated region
        $region41: #{tpu_custom_call.1} parent=39 // pred_check
          %p231 = pneg %p36
        $region42: #{tpu_custom_call.1} parent=39 // pred_check_branch
          %233 = sbr.rel (%p231) target = $region44
        $region43: #{tpu_custom_call.1} parent=39 // pred_region
          %p234 = scmp.lt.s32.totalorder %s16, 1
          %s235 = scalar_select %p234, %s16, 1
          %s236 = smul.addr %s235, 8
          %s237 = scalar_lea.vmem %s0, %s236
        $region44: #{tpu_custom_call.1} parent=39 // pred_fallthru
          _
      $region40: #{tpu_custom_call.1} parent=5 // pred_fallthru
        _
      %p238 = scmp.le.s32.totalorder 1, %s16
      %p239 = scmp.lt.s32.totalorder %s16, 3
      %p240 = pnand %p238, %p239
      %p241 = pneg %p240
      // Predicated region
      $region45: #{tpu_custom_call.1} parent=5 // pred_check
        _
      $region46: #{tpu_custom_call.1} parent=5 // pred_check_branch
        %243 = sbr.rel (%p240) target = $region48
      $region47: #{tpu_custom_call.1} parent=5 // pred_region
        %s244 = ssub.s32 %s16, 1
        %p245 = scmp.lt.s32.totalorder %s21, 1
        %s246 = scalar_select %p245, %s21, 1
        %s247 = smul.addr %s246, 8
        %s248 = scalar_lea.vmem %s0, %s247
        %p249 = pneg %p42
        %p250 = pneg %p39
        %p251 = pneg %p63
        %p252 = pneg %p60
        %p253 = pneg %p84
        %p254 = pneg %p81
        %p255 = pneg %p105
        %p256 = pneg %p102
        %p257 = pneg %p126
        %p258 = pneg %p123
        %p259 = pneg %p147
        %p260 = pneg %p144
        %p261 = pneg %p168
        %p262 = pneg %p165
        %p263 = pneg %p194
        %p264 = pneg %p191
        %s265 = sand.u32 %s181, 1
        %s266 = scalar_lea.sflag [#allocation3], %s265
        %s267 = sand.u32 %s181, 1
        %s268 = smul.addr %s267, 8
        %s269 = scalar_lea.vmem [#allocation2], %s268
        %p270 = scmp.lt.s32.totalorder %s21, 1
        %s271 = scalar_select %p270, %s21, 1
        %s272 = smul.addr %s271, 8
        %s273 = scalar_lea.vmem %s0, %s272
        %v275 = vld [vmem:[%s273] sm:$0xff]
        %v276 = vxor.u32 %v275, 2147483648
        %v277 = vmul.f32 %v276, 1.442695
        %v278 = vpow.pop %v277
        %v279 = vadd.f32 %v278, 1.0
        %v280 = vrcp.pop %v279
        %v281 = vmul.f32 1.0, %v280
        %283 = vrot.lane.b32.xlu0 %v281, 64
        %v284 = vpop.permute.xlu0 %283
        %v286 = vmul.f32 %v275, %v284
        %v287 = vpack.c.bf16 %v286, %v286
        %v288 = vld [vmem:[%s1] sm:$0xf]
        %v289 = vld [vmem:[%s1 + $0x4] sm:$0xf]
        %v290 = vld [vmem:[%s1 + $0x8] sm:$0xf]
        %v291 = vld [vmem:[%s1 + $0xc] sm:$0xf]
        %v292 = vld [vmem:[%s1 + $0x10] sm:$0xf]
        %v293 = vld [vmem:[%s1 + $0x14] sm:$0xf]
        %v294 = vld [vmem:[%s1 + $0x18] sm:$0xf]
        %v295 = vld [vmem:[%s1 + $0x1c] sm:$0xf]
        %v296 = vld [vmem:[%s2] sm:$0x1]
        %v298 = vlaneseq
        %v299 = vshrl.u32 %v298, 7
        %v300 = vsub.s32 0, %v299
        %v301 = vrot.slane %v296, %v300
        %v311 = vunpack.c.l.b16 %v288
        %v312 = vunpack.c.l.b16 %v289
        %v313 = vunpack.c.l.b16 %v290
        %v314 = vunpack.c.l.b16 %v291
        %v315 = vunpack.c.l.b16 %v292
        %v316 = vunpack.c.l.b16 %v293
        %v317 = vunpack.c.l.b16 %v294
        %v318 = vunpack.c.l.b16 %v295
        %v319 = vpack.c.b16 %v312, %v311
        %v320 = vpack.c.b16 %v314, %v313
        %v321 = vpack.c.b16 %v316, %v315
        %v322 = vpack.c.b16 %v318, %v317
        %vm327 = vcmask 523264
        %v329 = vsel %vm327, %v287, 0
        %331 = vmatprep.subr.bf16.mxu0 0
        %332 = vmatpush1.bf16.msra.mxu0 %v319
        %333 = vmatprep.subr.bf16.mxu0 0
        %334 = vmatpush1.bf16.msra.mxu0 %v320
        %335 = vmatprep.subr.bf16.mxu0 0
        %336 = vmatpush1.bf16.msra.mxu0 %v321
        %337 = vmatprep.subr.bf16.mxu0 0
        %338 = vmatpush1.bf16.msra.mxu0 %v322
        %339 = vmatprep.subr.bf16.mxu0 0
        %340 = vmatpush1.bf16.msra.mxu0 0
        %341 = vmatprep.subr.bf16.mxu0 0
        %342 = vmatpush1.bf16.msra.mxu0 0
        %343 = vmatprep.subr.bf16.mxu0 0
        %344 = vmatpush1.bf16.msra.mxu0 0
        %345 = vmatprep.subr.bf16.mxu0 0
        %346 = vmatpush1.bf16.msra.mxu0 0
        %347 = vmatprep.subr.bf16.mxu0 0
        %348 = vmatpush1.bf16.msra.mxu0 0
        %349 = vmatprep.subr.bf16.mxu0 0
        %350 = vmatpush1.bf16.msra.mxu0 0
        %351 = vmatprep.subr.bf16.mxu0 0
        %352 = vmatpush1.bf16.msra.mxu0 0
        %353 = vmatprep.subr.bf16.mxu0 0
        %354 = vmatpush1.bf16.msra.mxu0 0
        %355 = vmatprep.subr.bf16.mxu0 0
        %356 = vmatpush1.bf16.msra.mxu0 0
        %357 = vmatprep.subr.bf16.mxu0 0
        %358 = vmatpush1.bf16.msra.mxu0 0
        %359 = vmatprep.subr.bf16.mxu0 0
        %360 = vmatpush1.bf16.msra.mxu0 0
        %361 = vmatprep.subr.bf16.mxu0 0
        %362 = vmatpush1.bf16.msra.mxu0 0
        %363 = vmatprep.mubr.bf16.mxu0 0
        %364 = vmatmul.mubr.bf16.gmra.mrb[0].mxu0 %v329
        %v365 = vpop.f32.mrb[0].mxu0
        %v366 = vadd.f32 %v301, %v365
        %v367 = vpop.f32.mrb[0].mxu0
        %v368 = vpop.f32.mrb[0].mxu0
        %v369 = vpop.f32.mrb[0].mxu0
        %370 = vdwg.mxu0
        %v371 = vld [vmem:[%s3] sm:$0xf]
        %v372 = vld [vmem:[%s3 + $0x4] sm:$0xf]
        %v373 = vld [vmem:[%s3 + $0x8] sm:$0xf]
        %v374 = vld [vmem:[%s3 + $0xc] sm:$0xf]
        %v375 = vld [vmem:[%s3 + $0x10] sm:$0xf]
        %v376 = vld [vmem:[%s3 + $0x14] sm:$0xf]
        %v377 = vld [vmem:[%s3 + $0x18] sm:$0xf]
        %v378 = vld [vmem:[%s3 + $0x1c] sm:$0xf]
        %v379 = vld [vmem:[%s4] sm:$0x1]
        %v381 = vlaneseq
        %v382 = vshrl.u32 %v381, 7
        %v383 = vsub.s32 0, %v382
        %v384 = vrot.slane %v379, %v383
        %v394 = vunpack.c.l.b16 %v371
        %v395 = vunpack.c.l.b16 %v372
        %v396 = vunpack.c.l.b16 %v373
        %v397 = vunpack.c.l.b16 %v374
        %v398 = vunpack.c.l.b16 %v375
        %v399 = vunpack.c.l.b16 %v376
        %v400 = vunpack.c.l.b16 %v377
        %v401 = vunpack.c.l.b16 %v378
        %v402 = vpack.c.b16 %v395, %v394
        %v403 = vpack.c.b16 %v397, %v396
        %v404 = vpack.c.b16 %v399, %v398
        %v405 = vpack.c.b16 %v401, %v400
        %410 = vmatprep.subr.bf16.mxu0 0
        %411 = vmatpush1.bf16.msra.mxu0 %v402
        %412 = vmatprep.subr.bf16.mxu0 0
        %413 = vmatpush1.bf16.msra.mxu0 %v403
        %414 = vmatprep.subr.bf16.mxu0 0
        %415 = vmatpush1.bf16.msra.mxu0 %v404
        %416 = vmatprep.subr.bf16.mxu0 0
        %417 = vmatpush1.bf16.msra.mxu0 %v405
        %418 = vmatprep.subr.bf16.mxu0 0
        %419 = vmatpush1.bf16.msra.mxu0 0
        %420 = vmatprep.subr.bf16.mxu0 0
        %421 = vmatpush1.bf16.msra.mxu0 0
        %422 = vmatprep.subr.bf16.mxu0 0
        %423 = vmatpush1.bf16.msra.mxu0 0
        %424 = vmatprep.subr.bf16.mxu0 0
        %425 = vmatpush1.bf16.msra.mxu0 0
        %426 = vmatprep.subr.bf16.mxu0 0
        %427 = vmatpush1.bf16.msra.mxu0 0
        %428 = vmatprep.subr.bf16.mxu0 0
        %429 = vmatpush1.bf16.msra.mxu0 0
        %430 = vmatprep.subr.bf16.mxu0 0
        %431 = vmatpush1.bf16.msra.mxu0 0
        %432 = vmatprep.subr.bf16.mxu0 0
        %433 = vmatpush1.bf16.msra.mxu0 0
        %434 = vmatprep.subr.bf16.mxu0 0
        %435 = vmatpush1.bf16.msra.mxu0 0
        %436 = vmatprep.subr.bf16.mxu0 0
        %437 = vmatpush1.bf16.msra.mxu0 0
        %438 = vmatprep.subr.bf16.mxu0 0
        %439 = vmatpush1.bf16.msra.mxu0 0
        %440 = vmatprep.subr.bf16.mxu0 0
        %441 = vmatpush1.bf16.msra.mxu0 0
        %442 = vmatprep.mubr.bf16.mxu0 0
        %443 = vmatmul.mubr.bf16.gmra.mrb[0].mxu0 %v329
        %v444 = vpop.f32.mrb[0].mxu0
        %v445 = vadd.f32 %v384, %v444
        %v446 = vpop.f32.mrb[0].mxu0
        %v447 = vpop.f32.mrb[0].mxu0
        %v448 = vpop.f32.mrb[0].mxu0
        %449 = vdwg.mxu0
        %v450 = vxor.u32 %v445, 2147483648
        %v451 = vmul.f32 %v450, 1.442695
        %v452 = vpow.pop %v451
        %v453 = vadd.f32 %v452, 1.0
        %v454 = vrcp.pop %v453
        %v455 = vmul.f32 1.0, %v454
        %v456 = vmul.f32 %v366, %v455
        %v457 = vpack.c.bf16 %v456, %v456
        %v458 = vld [vmem:[%s5] sm:$0xf]
        %v459 = vld [vmem:[%s5 + $0x4] sm:$0xf]
        %v460 = vld [vmem:[%s5 + $0x8] sm:$0xf]
        %v461 = vld [vmem:[%s5 + $0xc] sm:$0xf]
        %v462 = vld [vmem:[%s6] sm:$0x1]
        %v464 = vlaneseq
        %v465 = vshrl.u32 %v464, 7
        %v466 = vsub.s32 0, %v465
        %v467 = vrot.slane %v462, %v466
        %v473 = vunpack.c.l.b16 %v458
        %v474 = vunpack.c.l.b16 %v459
        %v475 = vunpack.c.l.b16 %v460
        %v476 = vunpack.c.l.b16 %v461
        %v477 = vpack.c.b16 %v474, %v473
        %v478 = vpack.c.b16 %v476, %v475
        %vm481 = vcmask 261120
        %v483 = vsel %vm481, %v457, 0
        %485 = vmatprep.subr.bf16.mxu0 0
        %486 = vmatpush1.bf16.msra.mxu0 %v477
        %487 = vmatprep.subr.bf16.mxu0 0
        %488 = vmatpush1.bf16.msra.mxu0 %v478
        %489 = vmatprep.subr.bf16.mxu0 0
        %490 = vmatpush1.bf16.msra.mxu0 0
        %491 = vmatprep.subr.bf16.mxu0 0
        %492 = vmatpush1.bf16.msra.mxu0 0
        %493 = vmatprep.subr.bf16.mxu0 0
        %494 = vmatpush1.bf16.msra.mxu0 0
        %495 = vmatprep.subr.bf16.mxu0 0
        %496 = vmatpush1.bf16.msra.mxu0 0
        %497 = vmatprep.subr.bf16.mxu0 0
        %498 = vmatpush1.bf16.msra.mxu0 0
        %499 = vmatprep.subr.bf16.mxu0 0
        %500 = vmatpush1.bf16.msra.mxu0 0
        %501 = vmatprep.subr.bf16.mxu0 0
        %502 = vmatpush1.bf16.msra.mxu0 0
        %503 = vmatprep.subr.bf16.mxu0 0
        %504 = vmatpush1.bf16.msra.mxu0 0
        %505 = vmatprep.subr.bf16.mxu0 0
        %506 = vmatpush1.bf16.msra.mxu0 0
        %507 = vmatprep.subr.bf16.mxu0 0
        %508 = vmatpush1.bf16.msra.mxu0 0
        %509 = vmatprep.subr.bf16.mxu0 0
        %510 = vmatpush1.bf16.msra.mxu0 0
        %511 = vmatprep.subr.bf16.mxu0 0
        %512 = vmatpush1.bf16.msra.mxu0 0
        %513 = vmatprep.subr.bf16.mxu0 0
        %514 = vmatpush1.bf16.msra.mxu0 0
        %515 = vmatprep.subr.bf16.mxu0 0
        %516 = vmatpush1.bf16.msra.mxu0 0
        %517 = vmatprep.mubr.bf16.mxu0 0
        %518 = vmatmul.mubr.bf16.gmra.mrb[0].mxu0 %v483
        %v519 = vpop.f32.mrb[0].mxu0
        %v520 = vadd.f32 %v467, %v519
        %v521 = vpop.f32.mrb[0].mxu0
        %v522 = vpop.f32.mrb[0].mxu0
        %v523 = vpop.f32.mrb[0].mxu0
        %524 = vdwg.mxu0
        %525 = vst.msk [vmem:[%s269] sm:$0xff] %vm481, %v520
        %s526 = sand.u32 %s181, 1
        %s527 = scalar_lea.sflag [#allocation3], %s526
        %s528 = sand.u32 %s181, 1
        %s529 = smul.addr %s528, 8
        %s530 = scalar_lea.vmem [#allocation2], %s529
        // Predicated region
        $region49: #{tpu_custom_call.1} parent=47 // pred_check
          %p531 = pneg %p191
        $region50: #{tpu_custom_call.1} parent=47 // pred_check_branch
          %533 = sbr.rel (%p531) target = $region52
        $region51: #{tpu_custom_call.1} parent=47 // pred_region
          %s535 = ssub.s32 128, 128
          %536 = vsyncadd %s527, %s535
          %s537 = smul.addr %s21, 128
          %s538 = scalar_lea.hbm %s7, %s537
          %s540 = sshll.u32 %s530, 4
          %s541 = int_to_ptr.vmem [resolvable:$true] %s540
          %543 = dma.vmem_to_hbm [thread:$0]  %s541, 128, %s538, %s527
        $region52: #{tpu_custom_call.1} parent=47 // pred_fallthru
          _
      $region48: #{tpu_custom_call.1} parent=5 // pred_fallthru
        _
      %p544 = scmp.le.s32.totalorder 2, %s16
      // Predicated region
      $region53: #{tpu_custom_call.1} parent=5 // pred_check
        %p545 = pneg %p544
      $region54: #{tpu_custom_call.1} parent=5 // pred_check_branch
        %547 = sbr.rel (%p545) target = $region56
      $region55: #{tpu_custom_call.1} parent=5 // pred_region
        %s548 = ssub.s32 %s16, 2
        // Predicated region
        $region57: #{tpu_custom_call.1} parent=55 // pred_check
          %p549 = pneg %p197
        $region58: #{tpu_custom_call.1} parent=55 // pred_check_branch
          %551 = sbr.rel (%p549) target = $region60
        $region59: #{tpu_custom_call.1} parent=55 // pred_region
          %s552 = sand.u32 %s182, 1
          %s553 = scalar_lea.sflag [#allocation3], %s552
          %s554 = sand.u32 %s182, 1
          %s555 = smul.addr %s554, 8
          %s556 = scalar_lea.vmem [#allocation2], %s555
          %557 = dma.done %s553, 128
        $region60: #{tpu_custom_call.1} parent=55 // pred_fallthru
          _
      $region56: #{tpu_custom_call.1} parent=5 // pred_fallthru
        _
    $region6: #{tpu_custom_call.1} parent=1 // loop_footer
      %s20 = sadd.s32 1, %s16
    $region7: #{tpu_custom_call.1} parent=1 // loop_footer_branch
      %15 = sbr.rel target = $region3
    $region8: #{tpu_custom_call.1} parent=1 // loop_exit
      _
    %558 = vsyncpa [#allocation3], 1
    %s559 = scalar_lea.sflag [#allocation3], 1
    %560 = vsyncpa %s559, 1

</llo_original>
